<compile_context>
chip_gen: v5e
topology: v5e:2x2
jax: 0.10.0
libtpu: 0.0.40
codegen_flags: <defaults>
</compile_context>

<pallas_src>
import functools

import jax
import jax.numpy as jnp
from jax.experimental import pallas as pl
from jax.experimental.pallas import tpu as pltpu

LANE = 128
SUBLANE = 8
TARGET_BLOCK_BYTES = 2 * 1024 * 1024  # ~2 MiB per block: 3 arrays x 2 buffers
                                      # = 12 MiB, fits every generation's
                                      # default scoped VMEM.


def _gaussian_noise_kernel(x_ref, n_ref, o_ref, *, std):
    # Fused elementwise: clamp(x + noise * std, 0, 1) on the current tile.
    o_ref[...] = jnp.clip(x_ref[...] + n_ref[...] * std, 0.0, 1.0)


def gaussian_noise(x, std=0.02, key=None):
    """Equivalent of GaussianNoise(std).forward(x): clamp(x + randn_like(x)*std, 0, 1)."""
    if key is None:
        key = jax.random.PRNGKey(0)

    orig_shape = x.shape
    orig_dtype = x.dtype
    total = x.size

    # Keep memory-bound math in the native dtype when the VPU supports it.
    if orig_dtype in (jnp.float32, jnp.bfloat16):
        compute_dtype = orig_dtype
    else:
        compute_dtype = jnp.float32
    itemsize = jnp.dtype(compute_dtype).itemsize

    # Lane-dense slab width: widest multiple of 128 that divides the size.
    W = LANE
    for cand in (4096, 2048, 1024, 512, 256):
        if total % cand == 0:
            W = cand
            break

    rows = pl.cdiv(total, W)

    # Row tile sized for ~TARGET_BLOCK_BYTES, multiple of 8 sublanes.
    tile_r_target = max(SUBLANE, ((TARGET_BLOCK_BYTES // (W * itemsize)) // SUBLANE) * SUBLANE)

    if rows <= tile_r_target:
        # Small input: single block equal to the full array (no (8,128)
        # divisibility requirement in that case, no row padding).
        tile_r = rows
        rows_p = rows
    else:
        tile_r = tile_r_target
        rows_p = pl.cdiv(rows, tile_r) * tile_r

    padded = rows_p * W

    xf = jnp.ravel(x).astype(compute_dtype)
    if padded != total:
        xf = jnp.pad(xf, (0, padded - total))
    x2 = xf.reshape(rows_p, W)

    noise = jax.random.normal(key, (rows_p, W), dtype=compute_dtype)

    grid = (rows_p // tile_r,)
    out2 = pl.pallas_call(
        functools.partial(_gaussian_noise_kernel, std=std),
        out_shape=jax.ShapeDtypeStruct((rows_p, W), compute_dtype),
        grid_spec=pltpu.PrefetchScalarGridSpec(
            num_scalar_prefetch=0,
            grid=grid,
            in_specs=[pl.BlockSpec((tile_r, W), lambda i: (i, 0)),
                      pl.BlockSpec((tile_r, W), lambda i: (i, 0))],
            out_specs=pl.BlockSpec((tile_r, W), lambda i: (i, 0)),
        ),
        compiler_params=pltpu.CompilerParams(
            dimension_semantics=("parallel",)),
    )(x2, noise)

    out_flat = out2.reshape(-1)
    if padded != total:
        out_flat = out_flat[:total]
    return out_flat.reshape(orig_shape).astype(orig_dtype)


if __name__ == "__main__":
    key = jax.random.PRNGKey(0)
    kx, kn = jax.random.split(key)

    # NCHW input consistent with an image tensor: batch=2, channels=4, 16x16.
    x = jax.random.uniform(kx, (2, 4, 16, 16), dtype=jnp.float32)

    y = gaussian_noise(x, std=0.02, key=kn)
    y = jax.block_until_ready(y)

    # Sanity checks: same shape/dtype, values clamped to [0, 1],
    # perturbation magnitude consistent with std=0.02.
    assert y.shape == x.shape and y.dtype == x.dtype
    assert float(jnp.min(y)) >= 0.0 and float(jnp.max(y)) <= 1.0
    assert float(jnp.max(jnp.abs(y - x))) < 0.5  # noise is small

    print("KERNEL_OK")
</pallas_src>

<mosaic_0001>
module attributes {stable_mosaic.version = 11 : i64} {
  func.func @_gaussian_noise_kernel(%arg0: i32, %arg1: memref<1x2048xf32, #tpu.memory_space<vmem>>, %arg2: memref<1x2048xf32, #tpu.memory_space<vmem>>, %arg3: memref<1x2048xf32, #tpu.memory_space<vmem>>) attributes {dimension_semantics = [#tpu.dimension_semantics<parallel>], iteration_bounds = array<i64: 1>, scalar_prefetch = 0 : i64, scratch_operands = 0 : i64, tpu.core_type = #tpu.core_type<tc>, window_params = [{transform_indices = @transform_0, window_bounds = array<i64: 1, 2048>}, {transform_indices = @transform_1, window_bounds = array<i64: 1, 2048>}, {transform_indices = @transform_2, window_bounds = array<i64: 1, 2048>}]} {
    %c0 = arith.constant 0 : index
    %c0_0 = arith.constant 0 : index
    %0 = vector.load %arg1[%c0, %c0_0] : memref<1x2048xf32, #tpu.memory_space<vmem>>, vector<1x2048xf32>
    %c0_1 = arith.constant 0 : index
    %c0_2 = arith.constant 0 : index
    %1 = vector.load %arg2[%c0_1, %c0_2] : memref<1x2048xf32, #tpu.memory_space<vmem>>, vector<1x2048xf32>
    %cst = arith.constant 2.000000e-02 : f32
    %2 = vector.broadcast %cst : f32 to vector<1x2048xf32>
    %3 = arith.mulf %1, %2 : vector<1x2048xf32>
    %4 = arith.addf %0, %3 : vector<1x2048xf32>
    %cst_3 = arith.constant 0.000000e+00 : f32
    %cst_4 = arith.constant 1.000000e+00 : f32
    %5 = vector.broadcast %cst_3 : f32 to vector<1x2048xf32>
    %6 = arith.maximumf %5, %4 : vector<1x2048xf32>
    %7 = vector.broadcast %cst_4 : f32 to vector<1x2048xf32>
    %8 = arith.minimumf %7, %6 : vector<1x2048xf32>
    %c0_5 = arith.constant 0 : index
    %c0_6 = arith.constant 0 : index
    %9 = vector.load %arg3[%c0_5, %c0_6] : memref<1x2048xf32, #tpu.memory_space<vmem>>, vector<1x2048xf32>
    tpu.vector_store %arg3[%c0_5, %c0_6], %8 {strides = array<i32>} : memref<1x2048xf32, #tpu.memory_space<vmem>>, vector<1x2048xf32>,
    return
  }
  func.func @transform_0(%arg0: i32) -> (i32, i32) {
    %c0_i32 = arith.constant 0 : i32
    %c0_i32_0 = arith.constant 0 : i32
    return %arg0, %c0_i32 : i32, i32
  }
  func.func @transform_1(%arg0: i32) -> (i32, i32) {
    %c0_i32 = arith.constant 0 : i32
    %c0_i32_0 = arith.constant 0 : i32
    return %arg0, %c0_i32 : i32, i32
  }
  func.func @transform_2(%arg0: i32) -> (i32, i32) {
    %c0_i32 = arith.constant 0 : i32
    %c0_i32_0 = arith.constant 0 : i32
    return %arg0, %c0_i32 : i32, i32
  }
}

</mosaic_0001>

<llo_original>
// kernel: tpu_custom_call.1
$region0: #{tpu_custom_call.1}
  #allocation0 [shape = 'u32[]', space=smem, size = 0x4, offset = 0x4, fixed_abs, tag = 'smem constant byte address 0x4 - core index']
  #allocation1 [shape = 'u32[72,128]{1,0:T(1,128)}', space=vmem, size = 0x9000, scoped, tag = 'internal scratch']
  %s0 = inlined_call_operand.hbm [shape: f32[1,2048], index: 0, kind: input, shape index: {}]
  %s1 = inlined_call_operand.hbm [shape: f32[1,2048], index: 1, kind: input, shape index: {}]
  %s2 = inlined_call_operand.hbm [shape: f32[1,2048], index: 2, kind: output, shape index: {}]
  %s3 = sld [smem:[#allocation0]]
  $region26: #{tpu_custom_call.1} parent=0
    _
  %s5 = ssub.s32 1, %s3
  %s6 = scalar_select 0, %s5, %s3
  $region1: #{tpu_custom_call.1} parent=0
    #allocation2 [shape = 'u8[8192]{0}', space=vmem, size = 0x2000, scoped, tag = 'input window, operand 0, single buffered']
    #allocation3 [shape = 's32[1]{0}', space=sflag, size = 0x4, scoped, tag = 'scoped memory for tpu_custom_call.1']
    #allocation4 [shape = 's32[1]{0}', space=sflag, size = 0x4, scoped, tag = 'scoped memory for tpu_custom_call.1']
    #allocation5 [shape = 'u8[8192]{0}', space=vmem, size = 0x2000, scoped, tag = 'input window, operand 1, single buffered']
    #allocation6 [shape = 's32[1]{0}', space=sflag, size = 0x4, scoped, tag = 'scoped memory for tpu_custom_call.1']
    #allocation7 [shape = 'u8[8192]{0}', space=vmem, size = 0x2000, scoped, tag = 'output window, operand 0, single buffered']
    %7 = vsyncpa [#allocation3], 0
    %8 = vsyncpa [#allocation6], 0
    %9 = vsyncpa [#allocation4], 0
    // Predicated region
    $region2: #{tpu_custom_call.1} parent=1 // pred_check
      _
    $region3: #{tpu_custom_call.1} parent=1 // pred_check_branch
      %11 = sbr.rel (0) target = $region5
    $region4: #{tpu_custom_call.1} parent=1 // pred_region
      %13 = vsyncadd [#allocation3], 0
      %s15 = sshll.u32 %s0, 4
      %s16 = int_to_ptr.hbm [resolvable:$true] %s15
      %s17 = sshll.u32 [#allocation2], 4
      %s18 = int_to_ptr.vmem [resolvable:$true] %s17
      %20 = dma.hbm_to_vmem [thread:$0]  %s16, 256, %s18, [#allocation3]
    $region5: #{tpu_custom_call.1} parent=1 // pred_fallthru
      _
    // Predicated region
    $region6: #{tpu_custom_call.1} parent=1 // pred_check
      _
    $region7: #{tpu_custom_call.1} parent=1 // pred_check_branch
      %22 = sbr.rel (0) target = $region9
    $region8: #{tpu_custom_call.1} parent=1 // pred_region
      %24 = vsyncadd [#allocation6], 0
      %s26 = sshll.u32 %s1, 4
      %s27 = int_to_ptr.hbm [resolvable:$true] %s26
      %s28 = sshll.u32 [#allocation5], 4
      %s29 = int_to_ptr.vmem [resolvable:$true] %s28
      %31 = dma.hbm_to_vmem [thread:$0]  %s27, 256, %s29, [#allocation6]
    $region9: #{tpu_custom_call.1} parent=1 // pred_fallthru
      _
    // Predicated region
    $region10: #{tpu_custom_call.1} parent=1 // pred_check
      _
    $region11: #{tpu_custom_call.1} parent=1 // pred_check_branch
      %33 = sbr.rel (0) target = $region13
    $region12: #{tpu_custom_call.1} parent=1 // pred_region
      %35 = dma.done [#allocation3], 256
    $region13: #{tpu_custom_call.1} parent=1 // pred_fallthru
      _
    // Predicated region
    $region14: #{tpu_custom_call.1} parent=1 // pred_check
      _
    $region15: #{tpu_custom_call.1} parent=1 // pred_check_branch
      %37 = sbr.rel (0) target = $region17
    $region16: #{tpu_custom_call.1} parent=1 // pred_region
      %39 = dma.done [#allocation6], 256
    $region17: #{tpu_custom_call.1} parent=1 // pred_fallthru
      _
    %v40 = vld [vmem:[#allocation2] sm:$0xff]
    %v41 = vld [vmem:[#allocation2 + $0x8] sm:$0xff]
    %v42 = vld [vmem:[#allocation5] sm:$0xff]
    %v43 = vld [vmem:[#allocation5 + $0x8] sm:$0xff]
    %v44 = vmul.f32 %v42, 0.02
    %v45 = vmul.f32 %v43, 0.02
    %v46 = vadd.f32 %v40, %v44
    %v47 = vadd.f32 %v41, %v45
    %v48 = vmax.f32 %v46, 0.0
    %v49 = vmax.f32 %v47, 0.0
    %v50 = vmin.f32 %v48, 1.0
    %v51 = vmin.f32 %v49, 1.0
    %52 = vst [vmem:[#allocation7] sm:$0xff] %v50
    %53 = vst [vmem:[#allocation7 + $0x8] sm:$0xff] %v51
    // Predicated region
    $region18: #{tpu_custom_call.1} parent=1 // pred_check
      _
    $region19: #{tpu_custom_call.1} parent=1 // pred_check_branch
      %55 = sbr.rel (0) target = $region21
    $region20: #{tpu_custom_call.1} parent=1 // pred_region
      %57 = vsyncadd [#allocation4], 0
      %s59 = sshll.u32 [#allocation7], 4
      %s60 = int_to_ptr.vmem [resolvable:$true] %s59
      %s61 = sshll.u32 %s2, 4
      %s62 = int_to_ptr.hbm [resolvable:$true] %s61
      %64 = dma.vmem_to_hbm [thread:$0]  %s60, 256, %s62, [#allocation4]
    $region21: #{tpu_custom_call.1} parent=1 // pred_fallthru
      _
    // Predicated region
    $region22: #{tpu_custom_call.1} parent=1 // pred_check
      _
    $region23: #{tpu_custom_call.1} parent=1 // pred_check_branch
      %66 = sbr.rel (0) target = $region25
    $region24: #{tpu_custom_call.1} parent=1 // pred_region
      %68 = dma.done [#allocation4], 256
    $region25: #{tpu_custom_call.1} parent=1 // pred_fallthru
      _
    %69 = vsyncpa [#allocation3], 1
    %70 = vsyncpa [#allocation6], 1
    %71 = vsyncpa [#allocation4], 1

</llo_original>
